<compile_context>
chip_gen: v6e
topology: v6e:2x2x1
jax: 0.10.0
libtpu: 0.0.40
codegen_flags: <defaults>
</compile_context>

<pallas_src>
import functools

import jax
import jax.numpy as jnp
from jax import lax
from jax.experimental import pallas as pl
from jax.experimental.pallas import tpu as pltpu


def _rmsnorm_kernel(x_ref, w_ref, o_ref, *, eps: float, inv_dim: float):
    # x_ref: (tm, D) row tile; w_ref: (1, D) weight; o_ref: (tm, D) output.
    x = x_ref[...].astype(jnp.float32)                        # x.float()
    ms = jnp.sum(x * x, axis=-1, keepdims=True) * inv_dim     # mean(x^2, -1) as sum * (1/D)
    normed = x * lax.rsqrt(ms + eps)                          # rsqrt on the EUP slot
    w = w_ref[...].astype(jnp.float32)                        # f32 weight, hoisted
    o_ref[...] = (normed * w).astype(o_ref.dtype)             # single downcast on store


def _round_up(n: int, m: int) -> int:
    return ((n + m - 1) // m) * m


def _sublane_for_dtype(dtype) -> int:
    # Sublane packing: f32 -> 8, bf16/f16 -> 16, int8/fp8 -> 32.
    return {4: 8, 2: 16, 1: 32}.get(jnp.dtype(dtype).itemsize, 8)


def rmsnorm(x: jax.Array, weight: jax.Array, eps: float = 1e-6,
            row_tile: int | None = None) -> jax.Array:
    """RMSNorm over the last axis of x, matching the PyTorch module semantics."""
    orig_shape = x.shape
    dim = orig_shape[-1]
    assert weight.shape == (dim,)

    x2d = x.reshape(-1, dim)
    rows = x2d.shape[0]
    itemsize = jnp.dtype(x.dtype).itemsize
    sublane = _sublane_for_dtype(x.dtype)
    bytes_per_row = max(dim * itemsize, 1)

    # Generation-aware scoped-VMEM limit.
    # v5e/v6e: 128 MiB physical -> 64 MiB scoped is safe.
    # v7x:      64 MiB physical -> ~46 MiB scoped leaves headroom for compiler scratch.
    try:
        phys_vmem = int(pltpu.get_tpu_info().vmem_capacity_bytes)
    except Exception:
        phys_vmem = 64 << 20
    if phys_vmem >= (128 << 20):
        vmem_limit = 64 << 20
    else:
        vmem_limit = 46 << 20

    if row_tile is None:
        # Per-row VMEM footprint:
        #   2 x (tm*D*itemsize)  input  double-buffer
        #   2 x (tm*D*itemsize)  output double-buffer
        #   ~2 x (tm*D*4)        f32 temporaries (x upcast, normed)
        footprint_per_row = 4 * dim * itemsize + 2 * 4 * dim
        budget = (vmem_limit * 3) // 4           # headroom for compiler scratch
        max_tm = max(budget // footprint_per_row, sublane)

        # Target multi-MiB input slabs (~4 MiB) to amortize the ~0.35 us
        # per-grid-step overhead; clamp by the VMEM-derived ceiling.
        target_tile_bytes = 4 << 20
        tm = max(target_tile_bytes // bytes_per_row, sublane)
        tm = min(tm, max_tm)
    else:
        tm = row_tile

    # Don't allocate a tile larger than the (sublane-aligned) row count,
    # and keep tm a sublane multiple for unmasked dense stores on full tiles.
    tm = min(tm, _round_up(rows, sublane))
    tm = max((tm // sublane) * sublane, sublane)

    w2d = weight.reshape(1, dim)
    kernel = functools.partial(_rmsnorm_kernel, eps=eps, inv_dim=1.0 / dim)

    # Ragged tail: let Pallas mask the final partial block instead of padding
    # x in the wrapper (padding re-streams the whole tensor through HBM).
    grid = (pl.cdiv(rows, tm),)

    cost = pl.CostEstimate(
        flops=3 * rows * dim,                         # square + reduce + scale/mul
        transcendentals=rows,                         # one rsqrt per row
        bytes_accessed=2 * rows * dim * itemsize + dim * itemsize,
    )

    out = pl.pallas_call(
        kernel,
        out_shape=jax.ShapeDtypeStruct((rows, dim), x.dtype),
        grid_spec=pltpu.PrefetchScalarGridSpec(
            num_scalar_prefetch=0,
            grid=grid,
            in_specs=[
                pl.BlockSpec((tm, dim), lambda i: (i, 0)),
                pl.BlockSpec((1, dim), lambda i: (0, 0)),
            ],
            out_specs=pl.BlockSpec((tm, dim), lambda i: (i, 0)),
        ),
        compiler_params=pltpu.CompilerParams(
            # Row grid is independent per step; "parallel" lets Mosaic shard it
            # across v7x's 2 TensorCores (no-op on single-TC v5e/v6e).
            # TODO(synk): confirm in an xprof trace that both v7x TCs stream;
            # fall back to an explicit CORE_PARALLEL leading axis if not.
            dimension_semantics=("parallel",),
            vmem_limit_bytes=vmem_limit,
        ),
        cost_estimate=cost,
    )(x2d, w2d)

    return out.reshape(orig_shape)


def _rmsnorm_ref(x, weight, eps=1e-6):
    xf = x.astype(jnp.float32)
    normed = xf * lax.rsqrt(jnp.mean(xf * xf, axis=-1, keepdims=True) + eps)
    return (normed * weight.astype(jnp.float32)).astype(x.dtype)


if __name__ == "__main__":
    key = jax.random.PRNGKey(0)
    k0, k1, k2 = jax.random.split(key, 3)

    # Case 1: nominal small shape, ones weight (matches nn.Parameter(torch.ones(dim))).
    batch, seq, hidden = 2, 8, 128
    x = jax.random.normal(k0, (batch, seq, hidden), dtype=jnp.float32)
    weight = jnp.ones((hidden,), dtype=jnp.float32)
    out = jax.block_until_ready(rmsnorm(x, weight, eps=1e-6))
    ref = _rmsnorm_ref(x, weight, eps=1e-6)
    assert out.shape == x.shape and out.dtype == x.dtype
    assert jnp.allclose(out, ref, atol=1e-5, rtol=1e-5)

    # Case 2: ragged row count (3*5 = 15 rows, not sublane-aligned) with a
    # non-trivial weight — exercises the masked partial-tail-block path.
    x2 = jax.random.normal(k1, (3, 5, hidden), dtype=jnp.float32)
    w2 = 1.0 + 0.1 * jax.random.normal(k2, (hidden,), dtype=jnp.float32)
    out2 = jax.block_until_ready(rmsnorm(x2, w2, eps=1e-6))
    ref2 = _rmsnorm_ref(x2, w2, eps=1e-6)
    assert out2.shape == x2.shape and out2.dtype == x2.dtype
    assert jnp.allclose(out2, ref2, atol=1e-5, rtol=1e-5)

    print("KERNEL_OK")
</pallas_src>

<mosaic_0001>
module attributes {stable_mosaic.version = 11 : i64} {
  func.func @_rmsnorm_kernel(%arg0: i32, %arg1: memref<16x128xf32, #tpu.memory_space<vmem>>, %arg2: memref<1x128xf32, #tpu.memory_space<vmem>>, %arg3: memref<16x128xf32, #tpu.memory_space<vmem>>) attributes {dimension_semantics = [#tpu.dimension_semantics<parallel>], iteration_bounds = array<i64: 1>, scalar_prefetch = 0 : i64, scratch_operands = 0 : i64, tpu.core_type = #tpu.core_type<tc>, window_params = [{transform_indices = @transform_0, window_bounds = array<i64: 16, 128>}, {pipeline_mode = #tpu.pipeline_mode<synchronous>, transform_indices = @transform_1, window_bounds = array<i64: 1, 128>}, {transform_indices = @transform_2, window_bounds = array<i64: 16, 128>}]} {
    %c0 = arith.constant 0 : index
    %c0_0 = arith.constant 0 : index
    %0 = vector.load %arg1[%c0, %c0_0] : memref<16x128xf32, #tpu.memory_space<vmem>>, vector<16x128xf32>
    %1 = arith.mulf %0, %0 : vector<16x128xf32>
    %cst = arith.constant dense<0.000000e+00> : vector<16xf32>
    %2 = vector.multi_reduction <add>, %1, %cst [1] : vector<16x128xf32> to vector<16xf32>
    %3 = vector.shape_cast %2 : vector<16xf32> to vector<16x1xf32>
    %cst_1 = arith.constant 7.812500e-03 : f32
    %4 = vector.broadcast %cst_1 : f32 to vector<16x1xf32>
    %5 = arith.mulf %3, %4 : vector<16x1xf32>
    %cst_2 = arith.constant 9.99999997E-7 : f32
    %6 = vector.broadcast %cst_2 : f32 to vector<16x1xf32>
    %7 = arith.addf %5, %6 : vector<16x1xf32>
    %8 = math.rsqrt %7 : vector<16x1xf32>
    %9 = vector.broadcast %8 : vector<16x1xf32> to vector<16x128xf32>
    %10 = arith.mulf %0, %9 : vector<16x128xf32>
    %c0_3 = arith.constant 0 : index
    %c0_4 = arith.constant 0 : index
    %11 = vector.load %arg2[%c0_3, %c0_4] : memref<1x128xf32, #tpu.memory_space<vmem>>, vector<1x128xf32>
    %12 = vector.broadcast %11 : vector<1x128xf32> to vector<16x128xf32>
    %13 = arith.mulf %10, %12 : vector<16x128xf32>
    %c0_5 = arith.constant 0 : index
    %c0_6 = arith.constant 0 : index
    %14 = vector.load %arg3[%c0_5, %c0_6] : memref<16x128xf32, #tpu.memory_space<vmem>>, vector<16x128xf32>
    tpu.vector_store %arg3[%c0_5, %c0_6], %13 {strides = array<i32>} : memref<16x128xf32, #tpu.memory_space<vmem>>, vector<16x128xf32>,
    return
  }
  func.func @transform_0(%arg0: i32) -> (i32, i32) {
    %c0_i32 = arith.constant 0 : i32
    %c0_i32_0 = arith.constant 0 : i32
    return %arg0, %c0_i32 : i32, i32
  }
  func.func @transform_1(%arg0: i32) -> (i32, i32) {
    %c0_i32 = arith.constant 0 : i32
    %c0_i32_0 = arith.constant 0 : i32
    %c0_i32_1 = arith.constant 0 : i32
    return %c0_i32, %c0_i32_0 : i32, i32
  }
  func.func @transform_2(%arg0: i32) -> (i32, i32) {
    %c0_i32 = arith.constant 0 : i32
    %c0_i32_0 = arith.constant 0 : i32
    return %arg0, %c0_i32 : i32, i32
  }
}

</mosaic_0001>

<llo_original>
// kernel: tpu_custom_call.1
$region0: #{tpu_custom_call.1}
  #allocation0 [shape = 'u32[]', space=smem, size = 0x4, offset = 0x4, fixed_abs, tag = 'smem constant byte address 0x4 - core index']
  #allocation1 [shape = 'u32[144,128]{1,0:T(1,128)}', space=vmem, size = 0x12000, scoped, tag = 'internal scratch']
  %s0 = inlined_call_operand.hbm [shape: f32[16,128], index: 0, kind: input, shape index: {}]
  %s1 = inlined_call_operand.vmem [shape: f32[1,128], index: 1, kind: input, shape index: {}]
  %s2 = inlined_call_operand.hbm [shape: f32[16,128], index: 2, kind: output, shape index: {}]
  %s3 = sld [smem:[#allocation0]]
  $region22: #{tpu_custom_call.1} parent=0
    _
  %s5 = ssub.s32 1, %s3
  %s6 = scalar_select 0, %s5, %s3
  $region1: #{tpu_custom_call.1} parent=0
    #allocation2 [shape = 'u8[8192]{0}', space=vmem, size = 0x2000, scoped, tag = 'input window, operand 0, single buffered']
    #allocation3 [shape = 's32[1]{0}', space=sflag, size = 0x4, scoped, tag = 'scoped memory for tpu_custom_call.1']
    #allocation4 [shape = 's32[1]{0}', space=sflag, size = 0x4, scoped, tag = 'scoped memory for tpu_custom_call.1']
    #allocation5 [shape = 'u8[8192]{0}', space=vmem, size = 0x2000, scoped, tag = 'output window, operand 0, single buffered']
    %7 = vsyncpa [#allocation3], 0
    %8 = vsyncpa [#allocation4], 0
    // Predicated region
    $region2: #{tpu_custom_call.1} parent=1 // pred_check
      _
    $region3: #{tpu_custom_call.1} parent=1 // pred_check_branch
      %10 = sbr.rel (0) target = $region5
    $region4: #{tpu_custom_call.1} parent=1 // pred_region
      %s12 = ssub.s32 256, 256
      %13 = vsyncadd [#allocation3], %s12
      %s14 = sshll.u32 [#allocation2], 4
      %s15 = int_to_ptr.vmem [resolvable:$true] %s14
      %20 = dma.hbm_to_vmem [thread:$0]  %s0, 256, %s15, [#allocation3], 128, 128, 8
    $region5: #{tpu_custom_call.1} parent=1 // pred_fallthru
      _
    // Predicated region
    $region6: #{tpu_custom_call.1} parent=1 // pred_check
      _
    $region7: #{tpu_custom_call.1} parent=1 // pred_check_branch
      %22 = sbr.rel (0) target = $region9
    $region8: #{tpu_custom_call.1} parent=1 // pred_region
      _
    $region9: #{tpu_custom_call.1} parent=1 // pred_fallthru
      _
    // Predicated region
    $region10: #{tpu_custom_call.1} parent=1 // pred_check
      _
    $region11: #{tpu_custom_call.1} parent=1 // pred_check_branch
      %24 = sbr.rel (0) target = $region13
    $region12: #{tpu_custom_call.1} parent=1 // pred_region
      %25 = dma.done [#allocation3], 256
    $region13: #{tpu_custom_call.1} parent=1 // pred_fallthru
      _
    %v26 = vld [vmem:[#allocation2] sm:$0xff]
    %v27 = vld [vmem:[#allocation2 + $0x8] sm:$0xff]
    %v28 = vmul.f32 %v26, %v26
    %v29 = vmul.f32 %v27, %v27
    %30 = vadd.xlane.f32.xlu0 %v28
    %v31 = vpop.xlane.xlu0 %30
    %32 = vadd.xlane.f32.xlu0 %v29
    %v33 = vpop.xlane.xlu0 %32
    %v34 = vmul.f32 %v31, 0.0078125
    %v35 = vmul.f32 %v33, 0.0078125
    %v36 = vadd.f32 %v34, 1e-06
    %v37 = vadd.f32 %v35, 1e-06
    %v38 = vrsqrt.pop %v36
    %v39 = vrsqrt.pop %v37
    %v40 = vmul.f32 %v26, %v38
    %v41 = vmul.f32 %v27, %v39
    %v42 = vld [vmem:[%s1] sm:$0x1]
    %v44 = vlaneseq
    %v45 = vshrl.u32 %v44, 7
    %v46 = vsub.s32 0, %v45
    %v47 = vrot.slane %v42, %v46
    %v49 = vmul.f32 %v40, %v47
    %v50 = vmul.f32 %v41, %v47
    %51 = vst [vmem:[#allocation5] sm:$0xff] %v49
    %52 = vst [vmem:[#allocation5 + $0x8] sm:$0xff] %v50
    // Predicated region
    $region14: #{tpu_custom_call.1} parent=1 // pred_check
      _
    $region15: #{tpu_custom_call.1} parent=1 // pred_check_branch
      %54 = sbr.rel (0) target = $region17
    $region16: #{tpu_custom_call.1} parent=1 // pred_region
      %s56 = ssub.s32 256, 256
      %57 = vsyncadd [#allocation4], %s56
      %s58 = sshll.u32 [#allocation5], 4
      %s59 = int_to_ptr.vmem [resolvable:$true] %s58
      %64 = dma.vmem_to_hbm [thread:$0]  %s59, 256, %s2, [#allocation4], 128, 128, 8
    $region17: #{tpu_custom_call.1} parent=1 // pred_fallthru
      _
    // Predicated region
    $region18: #{tpu_custom_call.1} parent=1 // pred_check
      _
    $region19: #{tpu_custom_call.1} parent=1 // pred_check_branch
      %66 = sbr.rel (0) target = $region21
    $region20: #{tpu_custom_call.1} parent=1 // pred_region
      %67 = dma.done [#allocation4], 256
    $region21: #{tpu_custom_call.1} parent=1 // pred_fallthru
      _
    %68 = vsyncpa [#allocation3], 1
    %69 = vsyncpa [#allocation4], 1

</llo_original>
